<compile_context>
chip_gen: v7x
topology: tpu7x:2x2x1
jax: 0.10.0
libtpu: 0.0.40
codegen_flags: <defaults>
</compile_context>

<pallas_src>
import functools

import jax
import jax.numpy as jnp
from jax.experimental import pallas as pl
from jax.experimental.pallas import tpu as pltpu

H = W = 64
HW = H * W
CIN, COUT, KS = 3, 6, 3
PATCH = CIN * KS * KS              # 27
FC_IN, FC_OUT = COUT * HW, 10


# ---------------------- pltpu.roll convention probe --------------------------
# Expected: pltpu.roll matches jnp.roll (result[i] = x[(i - shift) mod N]).
# Probe it once so the in-kernel tap shifts are correct either way.
_ROLL_LIKE_JNP = None


def _roll_like_jnp():
    global _ROLL_LIKE_JNP
    if _ROLL_LIKE_JNP is None:
        def probe(x_ref, o_ref):
            o_ref[...] = pltpu.roll(x_ref[...], shift=1, axis=1)

        x = jnp.arange(8 * 128, dtype=jnp.float32).reshape(8, 128)
        y = pl.pallas_call(
            probe, out_shape=jax.ShapeDtypeStruct((8, 128), jnp.float32))(x)
        if bool(jnp.array_equal(y, jnp.roll(x, 1, axis=1))):
            _ROLL_LIKE_JNP = True
        elif bool(jnp.array_equal(y, jnp.roll(x, -1, axis=1))):
            _ROLL_LIKE_JNP = False
        else:
            raise RuntimeError("unexpected pltpu.roll semantics")
    return _ROLL_LIKE_JNP


# ----------------------------- fused Pallas kernel ---------------------------

def _make_kernel(tb: int, roll_like_jnp: bool):
    # Tap order (ky, kx) row-major; conv weight is laid out (9, COUT, CIN).
    taps = []
    for ky in range(KS):
        for kx in range(KS):
            dy, dx = ky - 1, kx - 1
            taps.append((dy, dx, dy * W + dx))

    def kernel(x_ref, wtap_ref, bconv_ref, w1_ref, b1_ref, o_ref, feat_ref):
        # x_ref    : (TB, 3, 4096) bf16   flattened NCHW images of the tile
        # wtap_ref : (9, 6, 3)     bf16   conv weight, (ky*3+kx, cout, cin)
        # bconv_ref: (6, 1)        f32    conv bias
        # w1_ref   : (6, 10, 4096) bf16   FC weight, resident (constant index)
        # b1_ref   : (1, 10)       f32    FC bias
        # o_ref    : (TB, 1, 10)   f32    logits
        # feat_ref : (TB, 6, 4096) bf16   scratch: ReLU'd conv activations

        # --- padding=1 border masks, hoisted out of the sample loop ---------
        pidx = jax.lax.broadcasted_iota(jnp.int32, (CIN, HW), 1)   # flat pixel
        pcol = pidx & (W - 1)                                      # W == 64
        row_ge1 = pidx >= W                  # y >= 1
        row_le = pidx < (H - 1) * W          # y <= H-2
        col_ge1 = pcol >= 1                  # x >= 1
        col_le = pcol <= W - 2               # x <= W-2
        masks = []
        for dy, dx, _ in taps:
            m = None
            if dy == -1:
                m = row_ge1
            elif dy == 1:
                m = row_le
            if dx == -1:
                m = col_ge1 if m is None else jnp.logical_and(m, col_ge1)
            elif dx == 1:
                m = col_le if m is None else jnp.logical_and(m, col_le)
            masks.append(m)                  # (3, 4096) bool, or None (center)

        # --- conv3x3 + bias + ReLU per sample; activations -> VMEM scratch ---
        for t in range(tb):
            xt = x_ref[t]                                        # (3, HW) bf16
            conv = None
            for tap_idx, (dy, dx, off) in enumerate(taps):
                if off == 0:
                    src = xt
                else:
                    shift = (-off if roll_like_jnp else off) % HW
                    src = pltpu.roll(xt, shift=shift, axis=1)
                m = masks[tap_idx]
                if m is not None:
                    src = jnp.where(m, src, jnp.zeros_like(src))
                part = jnp.dot(wtap_ref[tap_idx], src,
                               preferred_element_type=jnp.float32)  # (6, HW)
                conv = part if conv is None else conv + part
            conv = jnp.maximum(conv + bconv_ref[...], 0.0)          # f32
            feat_ref[t] = conv.astype(feat_ref.dtype)

        # --- FC with M = TB against the resident weight slab -----------------
        acc = jnp.zeros((tb, FC_OUT), jnp.float32)
        for c in range(COUT):
            acc = acc + jax.lax.dot_general(
                feat_ref[:, c, :], w1_ref[c],
                dimension_numbers=(((1,), (1,)), ((), ())),
                preferred_element_type=jnp.float32)                 # (TB, 10)
        o_ref[:, 0, :] = acc + b1_ref[...]

    return kernel


# --------------------------------- wrappers ----------------------------------

def _pick_tb(batch: int) -> int:
    """Largest batch tile that divides B while keeping >= 2 grid steps."""
    for tb in (8, 4, 2):
        if batch % tb == 0 and batch // tb >= 2:
            return tb
    return 1


def prepare_params(params):
    """One-time weight re-layout (outside the per-call forward)."""
    wc, bc, w1, b1 = params
    # conv weight -> (ky*3+kx, cout, cin): one small (6, 3) slab per tap.
    wtap = (wc.transpose(2, 3, 0, 1)
              .reshape(KS * KS, COUT, CIN)
              .astype(jnp.bfloat16))
    bconv = bc.reshape(COUT, 1).astype(jnp.float32)
    # fc weight -> (conv_channel, out, spatial): 4096 stays lane-dense, one
    # resident VMEM block, contraction against the lane axis (A @ B^T form).
    w1_r = (w1.reshape(FC_OUT, COUT, HW)
              .transpose(1, 0, 2)
              .astype(jnp.bfloat16))                               # (6, 10, 4096)
    b1_r = b1.reshape(1, FC_OUT).astype(jnp.float32)
    return wtap, bconv, w1_r, b1_r


@functools.partial(jax.jit, static_argnames=("tb", "roll_like_jnp"))
def _forward_impl(x, wtap, bconv, w1_r, b1_r, *, tb, roll_like_jnp):
    B = x.shape[0]
    xf = x.reshape(B, CIN, HW).astype(jnp.bfloat16)                # (B, 3, 4096)
    kernel = _make_kernel(tb, roll_like_jnp)

    flops = B * (2 * PATCH * HW * COUT + 2 * FC_IN * FC_OUT)
    bytes_accessed = (xf.size * 2 + wtap.size * 2 + w1_r.size * 2
                      + bconv.size * 4 + b1_r.size * 4 + B * FC_OUT * 4)

    out = pl.pallas_call(
        kernel,
        out_shape=jax.ShapeDtypeStruct((B, 1, FC_OUT), jnp.float32),
        grid_spec=pltpu.PrefetchScalarGridSpec(
            num_scalar_prefetch=0,
            grid=(B // tb,),
            in_specs=[
                pl.BlockSpec((tb, CIN, HW), lambda i: (i, 0, 0)),          # images
                pl.BlockSpec((KS * KS, COUT, CIN), lambda i: (0, 0, 0)),   # conv w
                pl.BlockSpec((COUT, 1), lambda i: (0, 0)),                 # conv b
                pl.BlockSpec((COUT, FC_OUT, HW), lambda i: (0, 0, 0)),     # fc w (resident)
                pl.BlockSpec((1, FC_OUT), lambda i: (0, 0)),               # fc b
            ],
            out_specs=pl.BlockSpec((tb, 1, FC_OUT), lambda i: (i, 0, 0)),
            scratch_shapes=[pltpu.VMEM((tb, COUT, HW), jnp.bfloat16)],
        ),
        compiler_params=pltpu.CompilerParams(
            dimension_semantics=("parallel",)),
        cost_estimate=pl.CostEstimate(
            flops=flops, transcendentals=0, bytes_accessed=bytes_accessed),
    )(xf, wtap, bconv, w1_r, b1_r)
    return out.reshape(B, FC_OUT)


def simple_cnn_forward(x, prepared):
    wtap, bconv, w1_r, b1_r = prepared
    return _forward_impl(x, wtap, bconv, w1_r, b1_r,
                         tb=_pick_tb(x.shape[0]),
                         roll_like_jnp=_roll_like_jnp())


# ------------------------------ init & reference -----------------------------

def init_params(key):
    k1, k2, k3, k4 = jax.random.split(key, 4)
    wc = jax.random.normal(k1, (COUT, CIN, KS, KS), jnp.float32) * 0.1
    bc = jax.random.normal(k2, (COUT,), jnp.float32) * 0.1
    w1 = jax.random.normal(k3, (FC_OUT, FC_IN), jnp.float32) * 0.01
    b1 = jax.random.normal(k4, (FC_OUT,), jnp.float32) * 0.01
    return wc, bc, w1, b1


def im2col(x):
    """Reference-only wrapper im2col: (B,3,64,64), pad=1 -> (B, 27, 4096)."""
    B = x.shape[0]
    xp = jnp.pad(x, ((0, 0), (0, 0), (1, 1), (1, 1)))
    cols = []
    for c in range(CIN):
        for ky in range(KS):
            for kx in range(KS):
                cols.append(xp[:, c, ky:ky + H, kx:kx + W])        # (B, 64, 64)
    patches = jnp.stack(cols, axis=1)                              # (B, 27, 64, 64)
    return patches.reshape(B, PATCH, HW)


def reference_forward(x, params):
    """Pure-jnp reference, same math & precision choices (bf16 MXU operands,
    f32 accumulation); flatten order matches PyTorch (C,H,W)."""
    wc, bc, w1, b1 = params
    B = x.shape[0]
    patches = im2col(x).astype(jnp.bfloat16)                       # (B, 27, 4096)
    wt = wc.reshape(COUT, PATCH).astype(jnp.bfloat16)              # (6, 27)
    conv = jnp.einsum('kp,bpx->bkx', wt, patches,
                      preferred_element_type=jnp.float32)          # (B, 6, 4096)
    conv = jnp.maximum(conv + bc[None, :, None], 0.0)
    feat = conv.reshape(B, FC_IN).astype(jnp.bfloat16)             # (B, 24576)
    out = jax.lax.dot_general(
        feat, w1.astype(jnp.bfloat16),
        dimension_numbers=(((1,), (1,)), ((), ())),
        preferred_element_type=jnp.float32) + b1
    return out


if __name__ == "__main__":
    key = jax.random.PRNGKey(0)
    kx, kp = jax.random.split(key)
    # fc1 expects 6*64*64 features, so spatial must be 64x64; batch kept small.
    x = jax.random.normal(kx, (2, CIN, H, W), jnp.float32)
    params = init_params(kp)
    prepared = prepare_params(params)

    out = simple_cnn_forward(x, prepared)
    out = jax.block_until_ready(out)

    ref = reference_forward(x, params)
    assert out.shape == (2, FC_OUT)
    err = float(jnp.max(jnp.abs(out - ref)))
    assert jnp.allclose(out, ref, atol=2e-3, rtol=2e-3), err

    print("KERNEL_OK")
</pallas_src>

<mosaic_0001>
module attributes {stable_mosaic.version = 11 : i64} {
  func.func @probe(%arg0: memref<8x128xf32, #tpu.memory_space<vmem>>, %arg1: memref<8x128xf32, #tpu.memory_space<vmem>>) attributes {dimension_semantics = [], scalar_prefetch = 0 : i64, scratch_operands = 0 : i64, tpu.core_type = #tpu.core_type<tc>} {
    %c0 = arith.constant 0 : index
    %c0_0 = arith.constant 0 : index
    %0 = vector.load %arg0[%c0, %c0_0] : memref<8x128xf32, #tpu.memory_space<vmem>>, vector<8x128xf32>
    %c1_i32 = arith.constant 1 : i32
    %1 = tpu.dynamic_rotate %0 by %c1_i32 dim 1 : vector<8x128xf32>, i32 -> vector<8x128xf32>
    %c0_1 = arith.constant 0 : index
    %c0_2 = arith.constant 0 : index
    %2 = vector.load %arg1[%c0_1, %c0_2] : memref<8x128xf32, #tpu.memory_space<vmem>>, vector<8x128xf32>
    tpu.vector_store %arg1[%c0_1, %c0_2], %1 {strides = array<i32>} : memref<8x128xf32, #tpu.memory_space<vmem>>, vector<8x128xf32>,
    return
  }
}

</mosaic_0001>

<llo_original>
// kernel: tpu_custom_call.1
$region0: #{tpu_custom_call.1}
  #allocation0 [shape = 'u32[]', space=smem, size = 0x4, offset = 0x4, fixed_abs, tag = 'smem constant byte address 0x4 - core index']
  #allocation1 [shape = 'u32[144,128]{1,0:T(1,128)}', space=vmem, size = 0x12000, scoped, tag = 'internal scratch']
  %s0 = inlined_call_operand.hbm [shape: f32[8,128], index: 0, kind: input, shape index: {}]
  %s1 = inlined_call_operand.hbm [shape: f32[8,128], index: 1, kind: output, shape index: {}]
  %s2 = sld [smem:[#allocation0]]
  $region18: #{tpu_custom_call.1} parent=0
    _
  %s4 = ssub.s32 1, %s2
  %s5 = scalar_select 0, %s4, %s2
  $region1: #{tpu_custom_call.1} parent=0
    #allocation2 [shape = 'u8[4096]{0}', space=vmem, size = 0x1000, scoped, tag = 'input window, operand 0, single buffered']
    #allocation3 [shape = 's32[1]{0}', space=sflag, size = 0x4, scoped, tag = 'scoped memory for tpu_custom_call.1']
    #allocation4 [shape = 's32[1]{0}', space=sflag, size = 0x4, scoped, tag = 'scoped memory for tpu_custom_call.1']
    #allocation5 [shape = 'u8[4096]{0}', space=vmem, size = 0x1000, scoped, tag = 'output window, operand 0, single buffered']
    %6 = vsyncpa [#allocation3], 0
    %7 = vsyncpa [#allocation4], 0
    // Predicated region
    $region2: #{tpu_custom_call.1} parent=1 // pred_check
      _
    $region3: #{tpu_custom_call.1} parent=1 // pred_check_branch
      %9 = sbr.rel (0) target = $region5
    $region4: #{tpu_custom_call.1} parent=1 // pred_region
      %s11 = ssub.s32 128, 128
      %12 = vsyncadd [#allocation3], %s11
      %s14 = sshll.u32 [#allocation2], 4
      %s15 = int_to_ptr.vmem [resolvable:$true] %s14
      %17 = dma.hbm_to_vmem [thread:$0]  %s0, 128, %s15, [#allocation3]
    $region5: #{tpu_custom_call.1} parent=1 // pred_fallthru
      _
    // Predicated region
    $region6: #{tpu_custom_call.1} parent=1 // pred_check
      _
    $region7: #{tpu_custom_call.1} parent=1 // pred_check_branch
      %19 = sbr.rel (0) target = $region9
    $region8: #{tpu_custom_call.1} parent=1 // pred_region
      %20 = dma.done [#allocation3], 128
    $region9: #{tpu_custom_call.1} parent=1 // pred_fallthru
      _
    %v21 = vld [vmem:[#allocation2] sm:$0xff]
    %22 = vrot.lane.b32.xlu0 %v21, 1
    %v23 = vpop.permute.xlu0 %22
    %24 = vst [vmem:[#allocation5] sm:$0xff] %v23
    // Predicated region
    $region10: #{tpu_custom_call.1} parent=1 // pred_check
      _
    $region11: #{tpu_custom_call.1} parent=1 // pred_check_branch
      %26 = sbr.rel (0) target = $region13
    $region12: #{tpu_custom_call.1} parent=1 // pred_region
      %s28 = ssub.s32 128, 128
      %29 = vsyncadd [#allocation4], %s28
      %s31 = sshll.u32 [#allocation5], 4
      %s32 = int_to_ptr.vmem [resolvable:$true] %s31
      %34 = dma.vmem_to_hbm [thread:$0]  %s32, 128, %s1, [#allocation4]
    $region13: #{tpu_custom_call.1} parent=1 // pred_fallthru
      _
    // Predicated region
    $region14: #{tpu_custom_call.1} parent=1 // pred_check
      _
    $region15: #{tpu_custom_call.1} parent=1 // pred_check_branch
      %36 = sbr.rel (0) target = $region17
    $region16: #{tpu_custom_call.1} parent=1 // pred_region
      %37 = dma.done [#allocation4], 128
    $region17: #{tpu_custom_call.1} parent=1 // pred_fallthru
      _
    %38 = vsyncpa [#allocation3], 1
    %39 = vsyncpa [#allocation4], 1

</llo_original>
